<compile_context>
chip_gen: v7x
topology: tpu7x:2x2x1
jax: 0.10.0
libtpu: 0.0.40
codegen_flags: <defaults>
</compile_context>

<pallas_src>
import jax
import jax.numpy as jnp
from jax.experimental import pallas as pl
from jax.experimental.pallas import tpu as pltpu

LANE = 128


def _round_up(x, m):
    return ((x + m - 1) // m) * m


def _policy_kernel(x_ref, w1_ref, b1_ref, w2_ref, b2_ref, out_ref):
    a = out_ref.shape[-1]  # real (unpadded) action_size

    # ---- layer 1: Linear + ReLU (MXU matmul, f32 accumulate) ----
    x = x_ref[...]                                                     # (TB, S)
    h = jnp.dot(x, w1_ref[...], preferred_element_type=jnp.float32)   # (TB, Hp)
    h = jnp.maximum(h + b1_ref[...], 0.0)                             # ReLU, (1,Hp) bcast

    # ---- layer 2: Linear (padded action columns carry a -1e30 bias) ----
    logits = jnp.dot(h, w2_ref[...], preferred_element_type=jnp.float32)
    logits = logits + b2_ref[...]                                      # (TB, Ap)

    # ---- Softmax over dim=1 (numerically stable); padded cols -> exp underflows to 0
    m = jnp.max(logits, axis=1, keepdims=True)
    e = jnp.exp(logits - m)
    # row-sum on the idle MXU instead of an XLU cross-lane reduce
    ones_col = jnp.ones((e.shape[1], 1), jnp.float32)
    denom = jnp.dot(e, ones_col, preferred_element_type=jnp.float32)   # (TB, 1)
    probs = e / denom                                                  # exact division

    # store only the real action columns (lane-masked vst; hidden under slack)
    out_ref[...] = probs[:, :a].astype(out_ref.dtype)


def prepare_params(w1, b1, w2, b2):
    """One-time lane-dense padding of the parameters (keep OUT of the hot path).

    w1: (S, H)  b1: (1, H)  w2: (H, A)  b2: (1, A)   (i.e. y = x @ W + b)
    Returns padded (w1p, b1p, w2p, b2p) and the real action_size A.
    Padded hidden units contribute 0 (relu(0+0)=0); padded action columns get a
    -1e30 bias so their softmax probability is exactly 0 (they are never stored).
    """
    S, H = w1.shape
    A = w2.shape[1]
    H_pad = _round_up(H, LANE)
    A_pad = _round_up(A, LANE)
    if H_pad != H:
        w1 = jnp.pad(w1, ((0, 0), (0, H_pad - H)))
        b1 = jnp.pad(b1, ((0, 0), (0, H_pad - H)))
        w2 = jnp.pad(w2, ((0, H_pad - H), (0, 0)))
    if A_pad != A:
        w2 = jnp.pad(w2, ((0, 0), (0, A_pad - A)))
        b2 = jnp.pad(b2, ((0, 0), (0, A_pad - A)), constant_values=-1e30)
    return w1, b1, w2, b2, A


def policy_forward(x, w1p, b1p, w2p, b2p, action_size, *, tile_b=2048):
    """x: (B, state_size) f32; params are the pre-padded outputs of prepare_params.
    Returns (B, action_size) action probabilities."""
    B, S = x.shape
    H_pad = w1p.shape[1]
    A_pad = w2p.shape[1]
    A = action_size

    # batch tile: multiple of 8 sublanes, never (much) larger than the batch
    tile_b = max(8, min(_round_up(tile_b, 8), _round_up(B, 8)))
    grid = (pl.cdiv(B, tile_b),)   # ragged tail handled by Pallas (masked writes)

    return pl.pallas_call(
        _policy_kernel,
        out_shape=jax.ShapeDtypeStruct((B, A), jnp.float32),
        grid=grid,
        in_specs=[
            pl.BlockSpec((tile_b, S), lambda i: (i, 0)),      # x: batch-tiled
            pl.BlockSpec((S, H_pad), lambda i: (0, 0)),       # w1: VMEM-resident
            pl.BlockSpec((1, H_pad), lambda i: (0, 0)),       # b1
            pl.BlockSpec((H_pad, A_pad), lambda i: (0, 0)),   # w2
            pl.BlockSpec((1, A_pad), lambda i: (0, 0)),       # b2
        ],
        out_specs=pl.BlockSpec((tile_b, A), lambda i: (i, 0)),
        compiler_params=pltpu.CompilerParams(
            dimension_semantics=("parallel",),
        ),
        cost_estimate=pl.CostEstimate(
            flops=2 * B * (S * H_pad + H_pad * A_pad),
            transcendentals=B * A_pad,
            bytes_accessed=B * (S + A) * 4,
        ),
    )(x, w1p, b1p, w2p, b2p)


def init_params(key, state_size, hidden_size, action_size):
    """Deterministic init mirroring nn.Linear's U(-1/sqrt(fan_in), 1/sqrt(fan_in))."""
    k1, k2, k3, k4 = jax.random.split(key, 4)
    lim1 = 1.0 / jnp.sqrt(jnp.float32(state_size))
    lim2 = 1.0 / jnp.sqrt(jnp.float32(hidden_size))
    # Stored as (in, out) == transpose of PyTorch's (out, in) weight.
    w1 = jax.random.uniform(k1, (state_size, hidden_size), jnp.float32, -lim1, lim1)
    b1 = jax.random.uniform(k2, (1, hidden_size), jnp.float32, -lim1, lim1)
    w2 = jax.random.uniform(k3, (hidden_size, action_size), jnp.float32, -lim2, lim2)
    b2 = jax.random.uniform(k4, (1, action_size), jnp.float32, -lim2, lim2)
    return w1, b1, w2, b2


if __name__ == "__main__":
    state_size, hidden_size, action_size = 16, 32, 8
    batch = 37  # deliberately not a multiple of the tile: exercises ragged tail

    key = jax.random.PRNGKey(0)
    kx, kp = jax.random.split(key)
    x = jax.random.normal(kx, (batch, state_size), jnp.float32)
    w1, b1, w2, b2 = init_params(kp, state_size, hidden_size, action_size)

    # pad parameters once, outside the hot path
    w1p, b1p, w2p, b2p, A = prepare_params(w1, b1, w2, b2)

    # small tile_b so the test exercises multiple grid steps (grid = 3) + a ragged tail
    probs = policy_forward(x, w1p, b1p, w2p, b2p, A, tile_b=16)
    jax.block_until_ready(probs)

    # reference check in plain JAX (unpadded math)
    h_ref = jnp.maximum(x @ w1 + b1, 0.0)
    logits_ref = h_ref @ w2 + b2
    probs_ref = jax.nn.softmax(logits_ref, axis=1)

    assert probs.shape == (batch, action_size)
    assert jnp.allclose(probs, probs_ref, atol=2e-3, rtol=2e-3)
    # exact division -> rows sum to 1 to f32 roundoff
    assert jnp.allclose(jnp.sum(probs, axis=1), 1.0, atol=1e-4)

    print("KERNEL_OK")
</pallas_src>

<mosaic_0001>
module attributes {stable_mosaic.version = 11 : i64} {
  func.func @_policy_kernel(%arg0: i32, %arg1: memref<16x16xf32, #tpu.memory_space<vmem>>, %arg2: memref<16x128xf32, #tpu.memory_space<vmem>>, %arg3: memref<1x128xf32, #tpu.memory_space<vmem>>, %arg4: memref<128x128xf32, #tpu.memory_space<vmem>>, %arg5: memref<1x128xf32, #tpu.memory_space<vmem>>, %arg6: memref<16x8xf32, #tpu.memory_space<vmem>>) attributes {dimension_semantics = [#tpu.dimension_semantics<parallel>], iteration_bounds = array<i64: 3>, scalar_prefetch = 0 : i64, scratch_operands = 0 : i64, tpu.core_type = #tpu.core_type<tc>, window_params = [{transform_indices = @transform_0, window_bounds = array<i64: 16, 16>}, {pipeline_mode = #tpu.pipeline_mode<synchronous>, transform_indices = @transform_1, window_bounds = array<i64: 16, 128>}, {pipeline_mode = #tpu.pipeline_mode<synchronous>, transform_indices = @transform_2, window_bounds = array<i64: 1, 128>}, {pipeline_mode = #tpu.pipeline_mode<synchronous>, transform_indices = @transform_3, window_bounds = array<i64: 128, 128>}, {pipeline_mode = #tpu.pipeline_mode<synchronous>, transform_indices = @transform_4, window_bounds = array<i64: 1, 128>}, {transform_indices = @transform_5, window_bounds = array<i64: 16, 8>}]} {
    %c0 = arith.constant 0 : index
    %c0_0 = arith.constant 0 : index
    %0 = vector.load %arg1[%c0, %c0_0] : memref<16x16xf32, #tpu.memory_space<vmem>>, vector<16x16xf32>
    %c0_1 = arith.constant 0 : index
    %c0_2 = arith.constant 0 : index
    %1 = vector.load %arg2[%c0_1, %c0_2] : memref<16x128xf32, #tpu.memory_space<vmem>>, vector<16x128xf32>
    %cst = arith.constant dense<0.000000e+00> : vector<16x128xf32>
    %2 = tpu.matmul %0, %1, %cst {dimension_numbers = #tpu.dot_dimension_numbers<[1], [0], [0], [1], [0, 0, 1, 1], [], []>} : vector<16x16xf32>, vector<16x128xf32>, vector<16x128xf32> -> vector<16x128xf32>
    %c0_3 = arith.constant 0 : index
    %c0_4 = arith.constant 0 : index
    %3 = vector.load %arg3[%c0_3, %c0_4] : memref<1x128xf32, #tpu.memory_space<vmem>>, vector<1x128xf32>
    %4 = vector.broadcast %3 : vector<1x128xf32> to vector<16x128xf32>
    %5 = arith.addf %2, %4 : vector<16x128xf32>
    %cst_5 = arith.constant 0.000000e+00 : f32
    %6 = vector.broadcast %cst_5 : f32 to vector<16x128xf32>
    %7 = arith.maximumf %5, %6 : vector<16x128xf32>
    %c0_6 = arith.constant 0 : index
    %c0_7 = arith.constant 0 : index
    %8 = vector.load %arg4[%c0_6, %c0_7] : memref<128x128xf32, #tpu.memory_space<vmem>>, vector<128x128xf32>
    %cst_8 = arith.constant dense<0.000000e+00> : vector<16x128xf32>
    %9 = tpu.matmul %7, %8, %cst_8 {dimension_numbers = #tpu.dot_dimension_numbers<[1], [0], [0], [1], [0, 0, 1, 1], [], []>} : vector<16x128xf32>, vector<128x128xf32>, vector<16x128xf32> -> vector<16x128xf32>
    %c0_9 = arith.constant 0 : index
    %c0_10 = arith.constant 0 : index
    %10 = vector.load %arg5[%c0_9, %c0_10] : memref<1x128xf32, #tpu.memory_space<vmem>>, vector<1x128xf32>
    %11 = vector.broadcast %10 : vector<1x128xf32> to vector<16x128xf32>
    %12 = arith.addf %9, %11 : vector<16x128xf32>
    %cst_11 = arith.constant dense<0xFF800000> : vector<16xf32>
    %13 = vector.multi_reduction <maximumf>, %12, %cst_11 [1] : vector<16x128xf32> to vector<16xf32>
    %14 = vector.shape_cast %13 : vector<16xf32> to vector<16x1xf32>
    %15 = vector.broadcast %14 : vector<16x1xf32> to vector<16x128xf32>
    %16 = arith.subf %12, %15 : vector<16x128xf32>
    %17 = math.exp %16 : vector<16x128xf32>
    %cst_12 = arith.constant 1.000000e+00 : f32
    %18 = vector.broadcast %cst_12 : f32 to vector<128x1xf32>
    %cst_13 = arith.constant dense<0.000000e+00> : vector<16x1xf32>
    %19 = tpu.matmul %17, %18, %cst_13 {dimension_numbers = #tpu.dot_dimension_numbers<[1], [0], [0], [1], [0, 0, 1, 1], [], []>} : vector<16x128xf32>, vector<128x1xf32>, vector<16x1xf32> -> vector<16x1xf32>
    %20 = vector.broadcast %19 : vector<16x1xf32> to vector<16x128xf32>
    %21 = arith.divf %17, %20 : vector<16x128xf32>
    %22 = vector.extract_strided_slice %21 {offsets = [0, 0], sizes = [16, 8], strides = [1, 1]} : vector<16x128xf32> to vector<16x8xf32>
    %c0_14 = arith.constant 0 : index
    %c0_15 = arith.constant 0 : index
    %23 = vector.load %arg6[%c0_14, %c0_15] : memref<16x8xf32, #tpu.memory_space<vmem>>, vector<16x8xf32>
    tpu.vector_store %arg6[%c0_14, %c0_15], %22 {strides = array<i32>} : memref<16x8xf32, #tpu.memory_space<vmem>>, vector<16x8xf32>,
    return
  }
  func.func @transform_0(%arg0: i32) -> (i32, i32) {
    %c0_i32 = arith.constant 0 : i32
    %c0_i32_0 = arith.constant 0 : i32
    return %arg0, %c0_i32 : i32, i32
  }
  func.func @transform_1(%arg0: i32) -> (i32, i32) {
    %c0_i32 = arith.constant 0 : i32
    %c0_i32_0 = arith.constant 0 : i32
    %c0_i32_1 = arith.constant 0 : i32
    return %c0_i32, %c0_i32_0 : i32, i32
  }
  func.func @transform_2(%arg0: i32) -> (i32, i32) {
    %c0_i32 = arith.constant 0 : i32
    %c0_i32_0 = arith.constant 0 : i32
    %c0_i32_1 = arith.constant 0 : i32
    return %c0_i32, %c0_i32_0 : i32, i32
  }
  func.func @transform_3(%arg0: i32) -> (i32, i32) {
    %c0_i32 = arith.constant 0 : i32
    %c0_i32_0 = arith.constant 0 : i32
    %c0_i32_1 = arith.constant 0 : i32
    return %c0_i32, %c0_i32_0 : i32, i32
  }
  func.func @transform_4(%arg0: i32) -> (i32, i32) {
    %c0_i32 = arith.constant 0 : i32
    %c0_i32_0 = arith.constant 0 : i32
    %c0_i32_1 = arith.constant 0 : i32
    return %c0_i32, %c0_i32_0 : i32, i32
  }
  func.func @transform_5(%arg0: i32) -> (i32, i32) {
    %c0_i32 = arith.constant 0 : i32
    %c0_i32_0 = arith.constant 0 : i32
    return %arg0, %c0_i32 : i32, i32
  }
}

</mosaic_0001>

<llo_original>
// kernel: tpu_custom_call.1
$region0: #{tpu_custom_call.1}
  #allocation0 [shape = 'u32[]', space=smem, size = 0x4, offset = 0x4, fixed_abs, tag = 'smem constant byte address 0x4 - core index']
  #allocation1 [shape = 'u32[144,128]{1,0:T(1,128)}', space=vmem, size = 0x12000, scoped, tag = 'internal scratch']
  %s0 = inlined_call_operand.vmem [shape: f32[37,16], index: 0, kind: input, shape index: {}]
  %s1 = inlined_call_operand.vmem [shape: f32[16,128], index: 1, kind: input, shape index: {}]
  %s2 = inlined_call_operand.vmem [shape: f32[1,128], index: 2, kind: input, shape index: {}]
  %s3 = inlined_call_operand.hbm [shape: f32[128,128], index: 3, kind: input, shape index: {}]
  %s4 = inlined_call_operand.vmem [shape: f32[1,128], index: 4, kind: input, shape index: {}]
  %s5 = inlined_call_operand.vmem [shape: f32[37,8], index: 5, kind: output, shape index: {}]
  %s6 = sld [smem:[#allocation0]]
  $region105: #{tpu_custom_call.1} parent=0
    _
  %s8 = ssub.s32 1, %s6
  %s9 = scalar_select 0, %s8, %s6
  $region1: #{tpu_custom_call.1} parent=0
    #allocation2 [shape = 'u8[65536]{0}', space=vmem, size = 0x10000, scoped, tag = 'input window, operand 3, single buffered']
    #allocation3 [shape = 's32[2]{0}', space=sflag, size = 0x8, scoped, tag = 'scoped memory for tpu_custom_call.1']
    #allocation4 [shape = 'u8[16384]{0}', space=vmem, size = 0x4000, scoped, tag = 'output window, operand 0']
    %10 = vsyncpa [#allocation3], 0
    loop: start=0, step=1, limit=5
    $region2: #{tpu_custom_call.1} parent=1 // loop_pre_header
      _
    $region3: #{tpu_custom_call.1} parent=1 // loop_header
      %s12 = sphi 0, %s16
      %p13 = scmp.ge.s32.totalorder %s12, 5
      %s22 = sphi 0, %s24
      %s25 = sphi 0, %s22
      %s26 = sphi 0, %s25
      %s42 = sphi 0, %s26
      %s46 = sphi 0, %s46
      %s48 = sphi 0, %s46
      %s49 = sphi 0, %s48
      %s63 = sphi 0, %s49
      %s67 = sphi 0, %s67
      %s69 = sphi 0, %s67
      %s70 = sphi 0, %s69
      %s84 = sphi 0, %s70
      %s88 = sphi 0, %s88
      %s90 = sphi 0, %s88
      %s91 = sphi 0, %s90
      %s105 = sphi 0, %s91
      %s109 = sphi 0, %s109
      %s111 = sphi 0, %s109
      %s112 = sphi 0, %s111
      %s126 = sphi 0, %s112
      %s132 = sphi 0, %s134
      %s135 = sphi 0, %s132
      %s136 = sphi 0, %s135
      %s152 = sphi 0, %s136
    $region4: #{tpu_custom_call.1} parent=1 // loop_header_branch
      %15 = sbr.rel (%p13) target = $region8
    $region5: #{tpu_custom_call.1} parent=1 // loop_body
      %s17 = ssub.s32 %s12, 1
      %s18 = ssub.s32 %s12, 2
      %s19 = sadd.s32 %s12, 1
      %s20 = ssub.s32 %s12, %s19
      %p21 = scmp.eq.s32.totalorder %s20, 0
      %s23 = sadd.s32 %s22, 1
      %s24 = scalar_select %p21, %s22, %s23
      %p27 = pneg %p21
      %p28 = scmp.eq.s32.totalorder %s12, 2
      %p29 = por %p27, %p28
      %p30 = scmp.ne.s32.totalorder %s22, %s25
      %p31 = scmp.eq.s32.totalorder %s12, 0
      %p32 = por %p30, %p31
      %p33 = scmp.ne.s32.totalorder %s22, %s25
      %p34 = scmp.eq.s32.totalorder %s17, 2
      %p35 = por %p33, %p34
      %p36 = scmp.ne.s32.totalorder %s25, %s26
      %p37 = scmp.eq.s32.totalorder %s17, 0
      %p38 = por %p36, %p37
      %p39 = scmp.ne.s32.totalorder %s25, %s26
      %p40 = scmp.eq.s32.totalorder %s18, 2
      %p41 = por %p39, %p40
      %p43 = scmp.ne.s32.totalorder %s26, %s42
      %p44 = scmp.eq.s32.totalorder %s18, 0
      %p45 = por %p43, %p44
      %s47 = sadd.s32 %s46, 1
      %p50 = scmp.eq.s32.totalorder %s12, 2
      %p51 = scmp.ne.s32.totalorder %s46, %s48
      %p52 = scmp.eq.s32.totalorder %s12, 0
      %p53 = por %p51, %p52
      %p54 = scmp.ne.s32.totalorder %s46, %s48
      %p55 = scmp.eq.s32.totalorder %s17, 2
      %p56 = por %p54, %p55
      %p57 = scmp.ne.s32.totalorder %s48, %s49
      %p58 = scmp.eq.s32.totalorder %s17, 0
      %p59 = por %p57, %p58
      %p60 = scmp.ne.s32.totalorder %s48, %s49
      %p61 = scmp.eq.s32.totalorder %s18, 2
      %p62 = por %p60, %p61
      %p64 = scmp.ne.s32.totalorder %s49, %s63
      %p65 = scmp.eq.s32.totalorder %s18, 0
      %p66 = por %p64, %p65
      %s68 = sadd.s32 %s67, 1
      %p71 = scmp.eq.s32.totalorder %s12, 2
      %p72 = scmp.ne.s32.totalorder %s67, %s69
      %p73 = scmp.eq.s32.totalorder %s12, 0
      %p74 = por %p72, %p73
      %p75 = scmp.ne.s32.totalorder %s67, %s69
      %p76 = scmp.eq.s32.totalorder %s17, 2
      %p77 = por %p75, %p76
      %p78 = scmp.ne.s32.totalorder %s69, %s70
      %p79 = scmp.eq.s32.totalorder %s17, 0
      %p80 = por %p78, %p79
      %p81 = scmp.ne.s32.totalorder %s69, %s70
      %p82 = scmp.eq.s32.totalorder %s18, 2
      %p83 = por %p81, %p82
      %p85 = scmp.ne.s32.totalorder %s70, %s84
      %p86 = scmp.eq.s32.totalorder %s18, 0
      %p87 = por %p85, %p86
      %s89 = sadd.s32 %s88, 1
      %p92 = scmp.eq.s32.totalorder %s12, 2
      %p93 = scmp.ne.s32.totalorder %s88, %s90
      %p94 = scmp.eq.s32.totalorder %s12, 0
      %p95 = por %p93, %p94
      %p96 = scmp.ne.s32.totalorder %s88, %s90
      %p97 = scmp.eq.s32.totalorder %s17, 2
      %p98 = por %p96, %p97
      %p99 = scmp.ne.s32.totalorder %s90, %s91
      %p100 = scmp.eq.s32.totalorder %s17, 0
      %p101 = por %p99, %p100
      %p102 = scmp.ne.s32.totalorder %s90, %s91
      %p103 = scmp.eq.s32.totalorder %s18, 2
      %p104 = por %p102, %p103
      %p106 = scmp.ne.s32.totalorder %s91, %s105
      %p107 = scmp.eq.s32.totalorder %s18, 0
      %p108 = por %p106, %p107
      %s110 = sadd.s32 %s109, 1
      %p113 = scmp.eq.s32.totalorder %s12, 2
      %p114 = scmp.ne.s32.totalorder %s109, %s111
      %p115 = scmp.eq.s32.totalorder %s12, 0
      %p116 = por %p114, %p115
      %p117 = scmp.ne.s32.totalorder %s109, %s111
      %p118 = scmp.eq.s32.totalorder %s17, 2
      %p119 = por %p117, %p118
      %p120 = scmp.ne.s32.totalorder %s111, %s112
      %p121 = scmp.eq.s32.totalorder %s17, 0
      %p122 = por %p120, %p121
      %p123 = scmp.ne.s32.totalorder %s111, %s112
      %p124 = scmp.eq.s32.totalorder %s18, 2
      %p125 = por %p123, %p124
      %p127 = scmp.ne.s32.totalorder %s112, %s126
      %p128 = scmp.eq.s32.totalorder %s18, 0
      %p129 = por %p127, %p128
      %s130 = ssub.s32 %s12, %s19
      %p131 = scmp.eq.s32.totalorder %s130, 0
      %s133 = sadd.s32 %s132, 1
      %s134 = scalar_select %p131, %s132, %s133
      %p137 = pneg %p131
      %p138 = scmp.eq.s32.totalorder %s12, 2
      %p139 = por %p137, %p138
      %p140 = scmp.ne.s32.totalorder %s132, %s135
      %p141 = scmp.eq.s32.totalorder %s12, 0
      %p142 = por %p140, %p141
      %p143 = scmp.ne.s32.totalorder %s132, %s135
      %p144 = scmp.eq.s32.totalorder %s17, 2
      %p145 = por %p143, %p144
      %p146 = scmp.ne.s32.totalorder %s135, %s136
      %p147 = scmp.eq.s32.totalorder %s17, 0
      %p148 = por %p146, %p147
      %p149 = scmp.ne.s32.totalorder %s135, %s136
      %p150 = scmp.eq.s32.totalorder %s18, 2
      %p151 = por %p149, %p150
      %p153 = scmp.ne.s32.totalorder %s136, %s152
      %p154 = scmp.eq.s32.totalorder %s18, 0
      %p155 = por %p153, %p154
      %p156 = scmp.le.s32.totalorder 1, %s12
      %p157 = scmp.lt.s32.totalorder %s12, 4
      %p158 = pnand %p156, %p157
      %p159 = pneg %p158
      // Predicated region
      $region9: #{tpu_custom_call.1} parent=5 // pred_check
        _
      $region10: #{tpu_custom_call.1} parent=5 // pred_check_branch
        %161 = sbr.rel (%p158) target = $region12
      $region11: #{tpu_custom_call.1} parent=5 // pred_region
        %s162 = ssub.s32 %s12, 1
        // Predicated region
        $region13: #{tpu_custom_call.1} parent=11 // pred_check
          %p163 = pneg %p59
        $region14: #{tpu_custom_call.1} parent=11 // pred_check_branch
          %165 = sbr.rel (%p163) target = $region16
        $region15: #{tpu_custom_call.1} parent=11 // pred_region
          _
        $region16: #{tpu_custom_call.1} parent=11 // pred_fallthru
          _
        // Predicated region
        $region17: #{tpu_custom_call.1} parent=11 // pred_check
          %p166 = pneg %p80
        $region18: #{tpu_custom_call.1} parent=11 // pred_check_branch
          %168 = sbr.rel (%p166) target = $region20
        $region19: #{tpu_custom_call.1} parent=11 // pred_region
          _
        $region20: #{tpu_custom_call.1} parent=11 // pred_fallthru
          _
        // Predicated region
        $region21: #{tpu_custom_call.1} parent=11 // pred_check
          %p169 = pneg %p101
        $region22: #{tpu_custom_call.1} parent=11 // pred_check_branch
          %171 = sbr.rel (%p169) target = $region24
        $region23: #{tpu_custom_call.1} parent=11 // pred_region
          %s173 = ssub.s32 2048, 2048
          %174 = vsyncadd [#allocation3], %s173
          %s175 = sshll.u32 [#allocation2], 4
          %s176 = int_to_ptr.vmem [resolvable:$true] %s175
          %181 = dma.hbm_to_vmem [thread:$0]  %s3, 2048, %s176, [#allocation3], 128, 128, 8
        $region24: #{tpu_custom_call.1} parent=11 // pred_fallthru
          _
        // Predicated region
        $region25: #{tpu_custom_call.1} parent=11 // pred_check
          %p182 = pneg %p122
        $region26: #{tpu_custom_call.1} parent=11 // pred_check_branch
          %184 = sbr.rel (%p182) target = $region28
        $region27: #{tpu_custom_call.1} parent=11 // pred_region
          _
        $region28: #{tpu_custom_call.1} parent=11 // pred_fallthru
          _
      $region12: #{tpu_custom_call.1} parent=5 // pred_fallthru
        _
      %p185 = scmp.lt.s32.totalorder %s12, 3
      // Predicated region
      $region29: #{tpu_custom_call.1} parent=5 // pred_check
        %p186 = pneg %p185
      $region30: #{tpu_custom_call.1} parent=5 // pred_check_branch
        %188 = sbr.rel (%p186) target = $region32
      $region31: #{tpu_custom_call.1} parent=5 // pred_region
        // Predicated region
        $region33: #{tpu_custom_call.1} parent=31 // pred_check
          %p189 = pneg %p32
        $region34: #{tpu_custom_call.1} parent=31 // pred_check_branch
          %191 = sbr.rel (%p189) target = $region36
        $region35: #{tpu_custom_call.1} parent=31 // pred_region
          %s192 = smul.u32 2, %s12
          %s193 = ssub.s32 5, %s192
          %p194 = scmp.lt.s32.totalorder %s193, 2
          %s195 = scalar_select %p194, %s193, 2
          %s196 = smul.u32 128, %s195
          %p197 = scmp.lt.s32.totalorder %s192, 4
          %s198 = scalar_select %p197, %s192, 4
          %s199 = smul.addr %s198, 8
          %s200 = scalar_lea.vmem %s0, %s199
          %s201 = smul.u32 2, %s12
          %s202 = ssub.s32 5, %s201
          %p203 = scmp.lt.s32.totalorder %s202, 2
          %s204 = scalar_select %p203, %s202, 2
          %s205 = smul.u32 128, %s204
        $region36: #{tpu_custom_call.1} parent=31 // pred_fallthru
          _
      $region32: #{tpu_custom_call.1} parent=5 // pred_fallthru
        _
      %p206 = scmp.le.s32.totalorder 1, %s12
      %p207 = scmp.lt.s32.totalorder %s12, 4
      %p208 = pnand %p206, %p207
      %p209 = pneg %p208
      // Predicated region
      $region37: #{tpu_custom_call.1} parent=5 // pred_check
        _
      $region38: #{tpu_custom_call.1} parent=5 // pred_check_branch
        %211 = sbr.rel (%p208) target = $region40
      $region39: #{tpu_custom_call.1} parent=5 // pred_region
        %s212 = ssub.s32 %s12, 1
        // Predicated region
        $region41: #{tpu_custom_call.1} parent=39 // pred_check
          %p213 = pneg %p101
        $region42: #{tpu_custom_call.1} parent=39 // pred_check_branch
          %215 = sbr.rel (%p213) target = $region44
        $region43: #{tpu_custom_call.1} parent=39 // pred_region
          %216 = dma.done [#allocation3], 2048
        $region44: #{tpu_custom_call.1} parent=39 // pred_fallthru
          _
        %s217 = smul.u32 2, %s17
        %s218 = ssub.s32 5, %s217
        %p219 = scmp.lt.s32.totalorder %s218, 2
        %s220 = scalar_select %p219, %s218, 2
        %s221 = smul.u32 128, %s220
        %p222 = scmp.lt.s32.totalorder %s217, 4
        %s223 = scalar_select %p222, %s217, 4
        %s224 = smul.addr %s223, 8
        %s225 = scalar_lea.vmem %s0, %s224
        %p226 = pneg %p38
        %p227 = pneg %p35
        %p228 = pneg %p59
        %p229 = pneg %p56
        %p230 = pneg %p80
        %p231 = pneg %p77
        %p232 = pneg %p101
        %p233 = pneg %p98
        %p234 = pneg %p122
        %p235 = pneg %p119
        %p236 = pneg %p148
        %p237 = pneg %p145
        %s238 = sand.u32 %s135, 1
        %s239 = sand.u32 %s135, 1
        %s240 = smul.addr %s239, 16
        %s241 = scalar_lea.vmem [#allocation4], %s240
        %s242 = smul.u32 2, %s17
        %s243 = ssub.s32 5, %s242
        %p244 = scmp.lt.s32.totalorder %s243, 2
        %s245 = scalar_select %p244, %s243, 2
        %s246 = smul.u32 128, %s245
        %p247 = scmp.lt.s32.totalorder %s242, 4
        %s248 = scalar_select %p247, %s242, 4
        %s249 = smul.addr %s248, 8
        %s250 = scalar_lea.vmem %s0, %s249
        %s251 = smul.u32 2, %s17
        %s252 = ssub.s32 5, %s251
        %p253 = scmp.lt.s32.totalorder %s252, 2
        %s254 = scalar_select %p253, %s252, 2
        %s255 = smul.u32 128, %s254
        %s256 = smul.u32 2, %s17
        %s257 = ssub.s32 5, %s256
        %p258 = scmp.lt.s32.totalorder %s257, 2
        %s259 = scalar_select %p258, %s257, 2
        %s260 = smul.u32 128, %s259
        %v261 = vld [vmem:[%s250] sm:$0xff]
        %v262 = vld [vmem:[%s250 + $0x8] sm:$0xff]
        %v263 = vld [vmem:[%s1] sm:$0xff]
        %v264 = vld [vmem:[%s1 + $0x8] sm:$0xff]
        %v265 = vld [vmem:[%s2] sm:$0x1]
        %v267 = vlaneseq
        %v268 = vshrl.u32 %v267, 7
        %v269 = vsub.s32 0, %v268
        %v270 = vrot.slane %v265, %v269
        %vm272 = vcmask 130048
        %v274 = vsel %vm272, %v261, 0
        %v277 = vsel %vm272, %v262, 0
        %279 = vmatprep.subr.mxu0 0.0
        %280 = vmatpush1.msra.mxu0 %v263
        %281 = vmatprep.subr.mxu0 0.0
        %282 = vmatpush1.msra.mxu0 %v264
        %283 = vmatprep.subr.mxu0 0.0
        %284 = vmatpush1.msra.mxu0 0.0
        %285 = vmatprep.subr.mxu0 0.0
        %286 = vmatpush1.msra.mxu0 0.0
        %287 = vmatprep.subr.mxu0 0.0
        %288 = vmatpush1.msra.mxu0 0.0
        %289 = vmatprep.subr.mxu0 0.0
        %290 = vmatpush1.msra.mxu0 0.0
        %291 = vmatprep.subr.mxu0 0.0
        %292 = vmatpush1.msra.mxu0 0.0
        %293 = vmatprep.subr.mxu0 0.0
        %294 = vmatpush1.msra.mxu0 0.0
        %295 = vmatprep.subr.mxu0 0.0
        %296 = vmatpush1.msra.mxu0 0.0
        %297 = vmatprep.subr.mxu0 0.0
        %298 = vmatpush1.msra.mxu0 0.0
        %299 = vmatprep.subr.mxu0 0.0
        %300 = vmatpush1.msra.mxu0 0.0
        %301 = vmatprep.subr.mxu0 0.0
        %302 = vmatpush1.msra.mxu0 0.0
        %303 = vmatprep.subr.mxu0 0.0
        %304 = vmatpush1.msra.mxu0 0.0
        %305 = vmatprep.subr.mxu0 0.0
        %306 = vmatpush1.msra.mxu0 0.0
        %307 = vmatprep.subr.mxu0 0.0
        %308 = vmatpush1.msra.mxu0 0.0
        %309 = vmatprep.subr.mxu0 0.0
        %310 = vmatpush1.msra.mxu0 0.0
        %311 = vmatprep.subr.mxu0 0.0
        %312 = vmatpush1.msra.mxu0 0.0
        %313 = vmatprep.subr.mxu0 0.0
        %314 = vmatpush1.msra.mxu0 0.0
        %315 = vmatprep.subr.mxu0 0.0
        %316 = vmatpush1.msra.mxu0 0.0
        %317 = vmatprep.subr.mxu0 0.0
        %318 = vmatpush1.msra.mxu0 0.0
        %319 = vmatprep.subr.mxu0 0.0
        %320 = vmatpush1.msra.mxu0 0.0
        %321 = vmatprep.subr.mxu0 0.0
        %322 = vmatpush1.msra.mxu0 0.0
        %323 = vmatprep.subr.mxu0 0.0
        %324 = vmatpush1.msra.mxu0 0.0
        %325 = vmatprep.subr.mxu0 0.0
        %326 = vmatpush1.msra.mxu0 0.0
        %327 = vmatprep.subr.mxu0 0.0
        %328 = vmatpush1.msra.mxu0 0.0
        %329 = vmatprep.subr.mxu0 0.0
        %330 = vmatpush1.msra.mxu0 0.0
        %331 = vmatprep.subr.mxu0 0.0
        %332 = vmatpush1.msra.mxu0 0.0
        %333 = vmatprep.subr.mxu0 0.0
        %334 = vmatpush1.msra.mxu0 0.0
        %335 = vmatprep.subr.mxu0 0.0
        %336 = vmatpush1.msra.mxu0 0.0
        %337 = vmatprep.subr.mxu0 0.0
        %338 = vmatpush1.msra.mxu0 0.0
        %339 = vmatprep.subr.mxu0 0.0
        %340 = vmatpush1.msra.mxu0 0.0
        %341 = vmatprep.subr.mxu0 0.0
        %342 = vmatpush1.msra.mxu0 0.0
        %343 = vmatprep.mubr.f32.mxu0 0.0
        %344 = vmatmul.mubr.f32.gmra.mrb[0].mxu0 %v274
        %v345 = vpop.f32.mrb[0].mxu0
        %v346 = vadd.f32 %v270, %v345
        %v347 = vpop.f32.mrb[0].mxu0
        %348 = vmatprep.mubr.f32.mxu0 0.0
        %349 = vmatmul.mubr.f32.gmra.mrb[0].mxu0 %v277
        %v350 = vpop.f32.mrb[0].mxu0
        %v351 = vadd.f32 %v270, %v350
        %v352 = vpop.f32.mrb[0].mxu0
        %353 = vdwg.mxu0
        %v354 = vmax.f32 %v346, 0.0
        %v355 = vmax.f32 %v351, 0.0
        %v356 = vld [vmem:[#allocation2] sm:$0xff]
        %v357 = vld [vmem:[#allocation2 + $0x8] sm:$0xff]
        %v358 = vld [vmem:[#allocation2 + $0x10] sm:$0xff]
        %v359 = vld [vmem:[#allocation2 + $0x18] sm:$0xff]
        %v360 = vld [vmem:[#allocation2 + $0x20] sm:$0xff]
        %v361 = vld [vmem:[#allocation2 + $0x28] sm:$0xff]
        %v362 = vld [vmem:[#allocation2 + $0x30] sm:$0xff]
        %v363 = vld [vmem:[#allocation2 + $0x38] sm:$0xff]
        %v364 = vld [vmem:[#allocation2 + $0x40] sm:$0xff]
        %v365 = vld [vmem:[#allocation2 + $0x48] sm:$0xff]
        %v366 = vld [vmem:[#allocation2 + $0x50] sm:$0xff]
        %v367 = vld [vmem:[#allocation2 + $0x58] sm:$0xff]
        %v368 = vld [vmem:[#allocation2 + $0x60] sm:$0xff]
        %v369 = vld [vmem:[#allocation2 + $0x68] sm:$0xff]
        %v370 = vld [vmem:[#allocation2 + $0x70] sm:$0xff]
        %v371 = vld [vmem:[#allocation2 + $0x78] sm:$0xff]
        %v372 = vld [vmem:[%s4] sm:$0x1]
        %v374 = vlaneseq
        %v375 = vshrl.u32 %v374, 7
        %v376 = vsub.s32 0, %v375
        %v377 = vrot.slane %v372, %v376
        %379 = vmatprep.subr.mxu0 0.0
        %380 = vmatpush1.msra.mxu0 %v356
        %381 = vmatprep.subr.mxu0 0.0
        %382 = vmatpush1.msra.mxu0 %v357
        %383 = vmatprep.subr.mxu0 0.0
        %384 = vmatpush1.msra.mxu0 %v358
        %385 = vmatprep.subr.mxu0 0.0
        %386 = vmatpush1.msra.mxu0 %v359
        %387 = vmatprep.subr.mxu0 0.0
        %388 = vmatpush1.msra.mxu0 %v360
        %389 = vmatprep.subr.mxu0 0.0
        %390 = vmatpush1.msra.mxu0 %v361
        %391 = vmatprep.subr.mxu0 0.0
        %392 = vmatpush1.msra.mxu0 %v362
        %393 = vmatprep.subr.mxu0 0.0
        %394 = vmatpush1.msra.mxu0 %v363
        %395 = vmatprep.subr.mxu0 0.0
        %396 = vmatpush1.msra.mxu0 %v364
        %397 = vmatprep.subr.mxu0 0.0
        %398 = vmatpush1.msra.mxu0 %v365
        %399 = vmatprep.subr.mxu0 0.0
        %400 = vmatpush1.msra.mxu0 %v366
        %401 = vmatprep.subr.mxu0 0.0
        %402 = vmatpush1.msra.mxu0 %v367
        %403 = vmatprep.subr.mxu0 0.0
        %404 = vmatpush1.msra.mxu0 %v368
        %405 = vmatprep.subr.mxu0 0.0
        %406 = vmatpush1.msra.mxu0 %v369
        %407 = vmatprep.subr.mxu0 0.0
        %408 = vmatpush1.msra.mxu0 %v370
        %409 = vmatprep.subr.mxu0 0.0
        %410 = vmatpush1.msra.mxu0 %v371
        %411 = vmatprep.subr.mxu0 0.0
        %412 = vmatpush1.msra.mxu0 0.0
        %413 = vmatprep.subr.mxu0 0.0
        %414 = vmatpush1.msra.mxu0 0.0
        %415 = vmatprep.subr.mxu0 0.0
        %416 = vmatpush1.msra.mxu0 0.0
        %417 = vmatprep.subr.mxu0 0.0
        %418 = vmatpush1.msra.mxu0 0.0
        %419 = vmatprep.subr.mxu0 0.0
        %420 = vmatpush1.msra.mxu0 0.0
        %421 = vmatprep.subr.mxu0 0.0
        %422 = vmatpush1.msra.mxu0 0.0
        %423 = vmatprep.subr.mxu0 0.0
        %424 = vmatpush1.msra.mxu0 0.0
        %425 = vmatprep.subr.mxu0 0.0
        %426 = vmatpush1.msra.mxu0 0.0
        %427 = vmatprep.subr.mxu0 0.0
        %428 = vmatpush1.msra.mxu0 0.0
        %429 = vmatprep.subr.mxu0 0.0
        %430 = vmatpush1.msra.mxu0 0.0
        %431 = vmatprep.subr.mxu0 0.0
        %432 = vmatpush1.msra.mxu0 0.0
        %433 = vmatprep.subr.mxu0 0.0
        %434 = vmatpush1.msra.mxu0 0.0
        %435 = vmatprep.subr.mxu0 0.0
        %436 = vmatpush1.msra.mxu0 0.0
        %437 = vmatprep.subr.mxu0 0.0
        %438 = vmatpush1.msra.mxu0 0.0
        %439 = vmatprep.subr.mxu0 0.0
        %440 = vmatpush1.msra.mxu0 0.0
        %441 = vmatprep.subr.mxu0 0.0
        %442 = vmatpush1.msra.mxu0 0.0
        %443 = vmatprep.mubr.f32.mxu0 0.0
        %444 = vmatmul.mubr.f32.gmra.mrb[0].mxu0 %v354
        %v445 = vpop.f32.mrb[0].mxu0
        %v446 = vadd.f32 %v377, %v445
        %v447 = vpop.f32.mrb[0].mxu0
        %448 = vmatprep.mubr.f32.mxu0 0.0
        %449 = vmatmul.mubr.f32.gmra.mrb[0].mxu0 %v355
        %v450 = vpop.f32.mrb[0].mxu0
        %v451 = vadd.f32 %v377, %v450
        %v452 = vpop.f32.mrb[0].mxu0
        %453 = vdwg.mxu0
        %454 = vmax.xlane.f32.xlu0 %v446
        %v455 = vpop.xlane.xlu0 %454
        %456 = vmax.xlane.f32.xlu0 %v451
        %v457 = vpop.xlane.xlu0 %456
        %v458 = vsub.f32 %v446, %v455
        %v459 = vsub.f32 %v451, %v457
        %v460 = vmul.f32 %v458, 1.442695
        %v461 = vpow.pop %v460
        %v462 = vmul.f32 %v459, 1.442695
        %v463 = vpow.pop %v462
        %464 = vmatprep.subr.mxu0 0.0
        %465 = vmatpush1.msra.mxu0 1.0
        %466 = vmatprep.subr.mxu0 0.0
        %467 = vmatpush1.msra.mxu0 1.0
        %468 = vmatprep.subr.mxu0 0.0
        %469 = vmatpush1.msra.mxu0 1.0
        %470 = vmatprep.subr.mxu0 0.0
        %471 = vmatpush1.msra.mxu0 1.0
        %472 = vmatprep.subr.mxu0 0.0
        %473 = vmatpush1.msra.mxu0 1.0
        %474 = vmatprep.subr.mxu0 0.0
        %475 = vmatpush1.msra.mxu0 1.0
        %476 = vmatprep.subr.mxu0 0.0
        %477 = vmatpush1.msra.mxu0 1.0
        %478 = vmatprep.subr.mxu0 0.0
        %479 = vmatpush1.msra.mxu0 1.0
        %480 = vmatprep.subr.mxu0 0.0
        %481 = vmatpush1.msra.mxu0 1.0
        %482 = vmatprep.subr.mxu0 0.0
        %483 = vmatpush1.msra.mxu0 1.0
        %484 = vmatprep.subr.mxu0 0.0
        %485 = vmatpush1.msra.mxu0 1.0
        %486 = vmatprep.subr.mxu0 0.0
        %487 = vmatpush1.msra.mxu0 1.0
        %488 = vmatprep.subr.mxu0 0.0
        %489 = vmatpush1.msra.mxu0 1.0
        %490 = vmatprep.subr.mxu0 0.0
        %491 = vmatpush1.msra.mxu0 1.0
        %492 = vmatprep.subr.mxu0 0.0
        %493 = vmatpush1.msra.mxu0 1.0
        %494 = vmatprep.subr.mxu0 0.0
        %495 = vmatpush1.msra.mxu0 1.0
        %496 = vmatprep.subr.mxu0 0.0
        %497 = vmatpush1.msra.mxu0 0.0
        %498 = vmatprep.subr.mxu0 0.0
        %499 = vmatpush1.msra.mxu0 0.0
        %500 = vmatprep.subr.mxu0 0.0
        %501 = vmatpush1.msra.mxu0 0.0
        %502 = vmatprep.subr.mxu0 0.0
        %503 = vmatpush1.msra.mxu0 0.0
        %504 = vmatprep.subr.mxu0 0.0
        %505 = vmatpush1.msra.mxu0 0.0
        %506 = vmatprep.subr.mxu0 0.0
        %507 = vmatpush1.msra.mxu0 0.0
        %508 = vmatprep.subr.mxu0 0.0
        %509 = vmatpush1.msra.mxu0 0.0
        %510 = vmatprep.subr.mxu0 0.0
        %511 = vmatpush1.msra.mxu0 0.0
        %512 = vmatprep.subr.mxu0 0.0
        %513 = vmatpush1.msra.mxu0 0.0
        %514 = vmatprep.subr.mxu0 0.0
        %515 = vmatpush1.msra.mxu0 0.0
        %516 = vmatprep.subr.mxu0 0.0
        %517 = vmatpush1.msra.mxu0 0.0
        %518 = vmatprep.subr.mxu0 0.0
        %519 = vmatpush1.msra.mxu0 0.0
        %520 = vmatprep.subr.mxu0 0.0
        %521 = vmatpush1.msra.mxu0 0.0
        %522 = vmatprep.subr.mxu0 0.0
        %523 = vmatpush1.msra.mxu0 0.0
        %524 = vmatprep.subr.mxu0 0.0
        %525 = vmatpush1.msra.mxu0 0.0
        %526 = vmatprep.subr.mxu0 0.0
        %527 = vmatpush1.msra.mxu0 0.0
        %528 = vmatprep.mubr.f32.mxu0 0.0
        %529 = vmatmul.mubr.f32.gmra.mrb[0].mxu0 %v461
        %v530 = vpop.f32.mrb[0].mxu0
        %v531 = vadd.f32 0.0, %v530
        %v532 = vpop.f32.mrb[0].mxu0
        %533 = vmatprep.mubr.f32.mxu0 0.0
        %534 = vmatmul.mubr.f32.gmra.mrb[0].mxu0 %v463
        %v535 = vpop.f32.mrb[0].mxu0
        %v536 = vadd.f32 0.0, %v535
        %v537 = vpop.f32.mrb[0].mxu0
        %538 = vdwg.mxu0
        %540 = vset.pattern.permute.xlu0 0
        %541 = vperm.xlu0 %540, %v531
        %v542 = vpop.permute.xlu0 %541
        %545 = vset.pattern.permute.xlu0 0
        %546 = vperm.xlu0 %545, %v536
        %v547 = vpop.permute.xlu0 %546
        %v549 = vrcp.pop %v542
        %v550 = vmul.f32 %v461, %v549
        %v551 = vrcp.pop %v547
        %v552 = vmul.f32 %v463, %v551
        %vm553 = vcmask 64512
        %554 = vst.msk [vmem:[%s241] sm:$0xff] %vm553, %v550
        %555 = vst.msk [vmem:[%s241 + $0x8] sm:$0xff] %vm553, %v552
        %s556 = sand.u32 %s135, 1
        %s557 = sand.u32 %s135, 1
        %s558 = smul.addr %s557, 16
        %s559 = scalar_lea.vmem [#allocation4], %s558
        // Predicated region
        $region45: #{tpu_custom_call.1} parent=39 // pred_check
          %p560 = pneg %p145
        $region46: #{tpu_custom_call.1} parent=39 // pred_check_branch
          %562 = sbr.rel (%p560) target = $region48
        $region47: #{tpu_custom_call.1} parent=39 // pred_region
          %s563 = smul.u32 2, %s17
          %s564 = ssub.s32 5, %s563
          %p565 = scmp.lt.s32.totalorder %s564, 2
          %s566 = scalar_select %p565, %s564, 2
          %s567 = smul.u32 128, %s566
          %p568 = scmp.ne.s32.totalorder 0, %s567
          %s569 = smul.addr %s563, 8
          %s570 = scalar_lea.vmem %s5, %s569
          // Predicated region
          $region49: #{tpu_custom_call.1} parent=47 // pred_check
            %p571 = pneg %p568
          $region50: #{tpu_custom_call.1} parent=47 // pred_check_branch
            %573 = sbr.rel (%p571) target = $region52
          $region51: #{tpu_custom_call.1} parent=47 // pred_region
            // Predicated region
            $region53: #{tpu_custom_call.1} parent=51 // pred_check
              _
            $region54: #{tpu_custom_call.1} parent=51 // pred_check_branch
              %575 = sbr.rel (0) target = $region56
            $region55: #{tpu_custom_call.1} parent=51 // pred_region
              // Predicated region
              $region75: #{tpu_custom_call.1} parent=55 // pred_check
                _
              $region76: #{tpu_custom_call.1} parent=55 // pred_check_branch
                %626 = sbr.rel (0) target = $region78
              $region77: #{tpu_custom_call.1} parent=55 // pred_region
                %s627 = sshrl.u32 %s566, 1
                // While loop
                $region79: #{tpu_custom_call.1} parent=77 // loop_pre_header
                  _
                $region80: #{tpu_custom_call.1} parent=77 // loop_header
                  %s629 = sphi 0, %s631
                  %p630 = scmp.ge.s32.totalorder %s629, %s627
                  %s634 = sphi 0, %s643
                  %s635 = sphi %s559, %s646
                  %s636 = sphi %s570, %s647
                $region81: #{tpu_custom_call.1} parent=77 // loop_header_branch
                  %633 = sbr.rel (%p630) target = $region85
                $region82: #{tpu_custom_call.1} parent=77 // loop_body
                  %v637 = vld [vmem:[%s635] sm:$0xff]
                  %638 = vst [vmem:[%s636] sm:$0xff] %v637
                  %v639 = vld [vmem:[%s635 + $0x8] sm:$0xff]
                  %640 = vst [vmem:[%s636 + $0x8] sm:$0xff] %v639
                  %s641 = sadd.s32 1, %s634
                  %p642 = scmp.ge.s32.totalorder %s641, %s627
                  %s643 = scalar_select %p642, 0, %s641
                  %s644 = smul.u32 %s643, 16
                  %s645 = smul.u32 %s643, 16
                  %s646 = scalar_lea.vmem %s559, %s644 [#allocation4]
                  %s647 = scalar_lea.vmem %s570, %s645
                $region83: #{tpu_custom_call.1} parent=77 // loop_footer
                  %s631 = sadd.s32 %s629, 1
                $region84: #{tpu_custom_call.1} parent=77 // loop_footer_branch
                  %628 = sbr.rel target = $region80
                $region85: #{tpu_custom_call.1} parent=77 // loop_exit
                  _
                %s648 = sshrl.u32 %s566, 1
                %s649 = sand.u32 %s566, 1
                %s650 = smul.u32 %s648, 2
                %s651 = smul.u32 8, %s650
                %s652 = scalar_lea.vmem %s559, %s651 [#allocation4]
                %s653 = smul.u32 8, %s650
                %s654 = scalar_lea.vmem %s570, %s653
                // While loop
                $region86: #{tpu_custom_call.1} parent=77 // loop_pre_header
                  _
                $region87: #{tpu_custom_call.1} parent=77 // loop_header
                  %s656 = sphi 0, %s658
                  %p657 = scmp.ge.s32.totalorder %s656, %s649
                  %s661 = sphi 0, %s668
                  %s662 = sphi %s652, %s671
                  %s663 = sphi %s654, %s672
                $region88: #{tpu_custom_call.1} parent=77 // loop_header_branch
                  %660 = sbr.rel (%p657) target = $region92
                $region89: #{tpu_custom_call.1} parent=77 // loop_body
                  %v664 = vld [vmem:[%s662] sm:$0xff]
                  %665 = vst [vmem:[%s663] sm:$0xff] %v664
                  %s666 = sadd.s32 1, %s661
                  %p667 = scmp.ge.s32.totalorder %s666, %s649
                  %s668 = scalar_select %p667, 0, %s666
                  %s669 = smul.u32 %s668, 8
                  %s670 = smul.u32 %s668, 8
                  %s671 = scalar_lea.vmem %s652, %s669 [#allocation4]
                  %s672 = scalar_lea.vmem %s654, %s670
                $region90: #{tpu_custom_call.1} parent=77 // loop_footer
                  %s658 = sadd.s32 %s656, 1
                $region91: #{tpu_custom_call.1} parent=77 // loop_footer_branch
                  %655 = sbr.rel target = $region87
                $region92: #{tpu_custom_call.1} parent=77 // loop_exit
                  _
              $region78: #{tpu_custom_call.1} parent=55 // pred_fallthru
                _
              // Predicated region
              $region93: #{tpu_custom_call.1} parent=55 // pred_check
                _
              $region94: #{tpu_custom_call.1} parent=55 // pred_check_branch
                %674 = sbr.rel target = $region96
              $region95: #{tpu_custom_call.1} parent=55 // pred_region
                _
              $region96: #{tpu_custom_call.1} parent=55 // pred_fallthru
                _
            $region56: #{tpu_custom_call.1} parent=51 // pred_fallthru
              _
            // Predicated region
            $region57: #{tpu_custom_call.1} parent=51 // pred_check
              _
            $region58: #{tpu_custom_call.1} parent=51 // pred_check_branch
              %577 = sbr.rel target = $region60
            $region59: #{tpu_custom_call.1} parent=51 // pred_region
              %s579 = sshrl.u32 %s566, 1
              // While loop
              $region61: #{tpu_custom_call.1} parent=59 // loop_pre_header
                _
              $region62: #{tpu_custom_call.1} parent=59 // loop_header
                %s581 = sphi 0, %s583
                %p582 = scmp.ge.s32.totalorder %s581, %s579
                %s586 = sphi 0, %s595
                %s587 = sphi %s559, %s598
                %s588 = sphi %s570, %s599
              $region63: #{tpu_custom_call.1} parent=59 // loop_header_branch
                %585 = sbr.rel (%p582) target = $region67
              $region64: #{tpu_custom_call.1} parent=59 // loop_body
                %v589 = vld [vmem:[%s587] sm:$0xff]
                %590 = vst [vmem:[%s588] sm:$0xff] %v589
                %v591 = vld [vmem:[%s587 + $0x8] sm:$0xff]
                %592 = vst [vmem:[%s588 + $0x8] sm:$0xff] %v591
                %s593 = sadd.s32 1, %s586
                %p594 = scmp.ge.s32.totalorder %s593, %s579
                %s595 = scalar_select %p594, 0, %s593
                %s596 = smul.u32 %s595, 16
                %s597 = smul.u32 %s595, 16
                %s598 = scalar_lea.vmem %s559, %s596 [#allocation4]
                %s599 = scalar_lea.vmem %s570, %s597
              $region65: #{tpu_custom_call.1} parent=59 // loop_footer
                %s583 = sadd.s32 %s581, 1
              $region66: #{tpu_custom_call.1} parent=59 // loop_footer_branch
                %580 = sbr.rel target = $region62
              $region67: #{tpu_custom_call.1} parent=59 // loop_exit
                _
              %s600 = sshrl.u32 %s566, 1
              %s601 = sand.u32 %s566, 1
              %s602 = smul.u32 %s600, 2
              %s603 = smul.u32 8, %s602
              %s604 = scalar_lea.vmem %s559, %s603 [#allocation4]
              %s605 = smul.u32 8, %s602
              %s606 = scalar_lea.vmem %s570, %s605
              // While loop
              $region68: #{tpu_custom_call.1} parent=59 // loop_pre_header
                _
              $region69: #{tpu_custom_call.1} parent=59 // loop_header
                %s608 = sphi 0, %s610
                %p609 = scmp.ge.s32.totalorder %s608, %s601
                %s613 = sphi 0, %s620
                %s614 = sphi %s604, %s623
                %s615 = sphi %s606, %s624
              $region70: #{tpu_custom_call.1} parent=59 // loop_header_branch
                %612 = sbr.rel (%p609) target = $region74
              $region71: #{tpu_custom_call.1} parent=59 // loop_body
                %v616 = vld [vmem:[%s614] sm:$0xff]
                %617 = vst [vmem:[%s615] sm:$0xff] %v616
                %s618 = sadd.s32 1, %s613
                %p619 = scmp.ge.s32.totalorder %s618, %s601
                %s620 = scalar_select %p619, 0, %s618
                %s621 = smul.u32 %s620, 8
                %s622 = smul.u32 %s620, 8
                %s623 = scalar_lea.vmem %s604, %s621 [#allocation4]
                %s624 = scalar_lea.vmem %s606, %s622
              $region72: #{tpu_custom_call.1} parent=59 // loop_footer
                %s610 = sadd.s32 %s608, 1
              $region73: #{tpu_custom_call.1} parent=59 // loop_footer_branch
                %607 = sbr.rel target = $region69
              $region74: #{tpu_custom_call.1} parent=59 // loop_exit
                _
            $region60: #{tpu_custom_call.1} parent=51 // pred_fallthru
              _
          $region52: #{tpu_custom_call.1} parent=47 // pred_fallthru
            _
          %675 = vnop
        $region48: #{tpu_custom_call.1} parent=39 // pred_fallthru
          _
      $region40: #{tpu_custom_call.1} parent=5 // pred_fallthru
        _
      %p676 = scmp.le.s32.totalorder 2, %s12
      // Predicated region
      $region97: #{tpu_custom_call.1} parent=5 // pred_check
        %p677 = pneg %p676
      $region98: #{tpu_custom_call.1} parent=5 // pred_check_branch
        %679 = sbr.rel (%p677) target = $region100
      $region99: #{tpu_custom_call.1} parent=5 // pred_region
        %s680 = ssub.s32 %s12, 2
        // Predicated region
        $region101: #{tpu_custom_call.1} parent=99 // pred_check
          %p681 = pneg %p151
        $region102: #{tpu_custom_call.1} parent=99 // pred_check_branch
          %683 = sbr.rel (%p681) target = $region104
        $region103: #{tpu_custom_call.1} parent=99 // pred_region
          %s684 = sand.u32 %s136, 1
          %s685 = sand.u32 %s136, 1
          %s686 = smul.addr %s685, 16
          %s687 = scalar_lea.vmem [#allocation4], %s686
        $region104: #{tpu_custom_call.1} parent=99 // pred_fallthru
          _
      $region100: #{tpu_custom_call.1} parent=5 // pred_fallthru
        _
    $region6: #{tpu_custom_call.1} parent=1 // loop_footer
      %s16 = sadd.s32 1, %s12
    $region7: #{tpu_custom_call.1} parent=1 // loop_footer_branch
      %11 = sbr.rel target = $region3
    $region8: #{tpu_custom_call.1} parent=1 // loop_exit
      _
    %688 = vsyncpa [#allocation3], 1
    %s689 = scalar_lea.sflag [#allocation3], 1
    %690 = vsyncpa %s689, 1

</llo_original>
